<compile_context>
chip_gen: v6e
topology: v6e:2x2x1
jax: 0.10.0
libtpu: 0.0.40
codegen_flags: <defaults>
</compile_context>

<pallas_src>
import functools

import jax
import jax.numpy as jnp
from jax.experimental import pallas as pl
from jax.experimental.pallas import tpu as pltpu

# --- deterministic "opt / mm_params / sensor_params" constants -----------------
TAU = 0.5            # opt.tau          : time step of the CV motion model
SIGMA_Z = 1.0        # sensor noise std : Gaussian measurement model
SENSOR_SIZE = 100.0
_NEG_HALF_INV_VAR = -0.5 / (SIGMA_Z * SIGMA_Z)


def _apf_step_kernel(locs_ref, vels_ref, lnw_ref, z_ref,
                     new_locs_ref, new_lnw_ref):
    """One APF time-step for a block of bb batch elements.

    Block shapes (per grid step b) -- native PyTorch layout, no relayout:
      locs_ref / vels_ref : (bb, P, 2T)   particles on sublanes, (targ,xy) on lanes
      lnw_ref             : (bb, P)       batch on sublanes, particles on lanes
      z_ref               : (bb, 1, 2T)   measured target positions
      new_locs_ref        : (bb, P, 2T)
      new_lnw_ref         : (bb, P)
    """
    locs = locs_ref[...]
    vels = vels_ref[...]

    # --- motion model (mm): constant-velocity F per particle/target -----------
    # F = [[1, tau], [0, 1]] per (pos, vel) pair  =>  pos' = pos + tau * vel
    # TODO(synk): process-noise sampling from mm_params.Q and the NN3 proposal
    #             of apf.update_apf_torch are omitted (deterministic propagation).
    new_locs = locs + TAU * vels
    new_locs_ref[...] = new_locs

    # --- sensor model (sm) + APF weight update ---------------------------------
    diff = new_locs - z_ref[...]                   # (bb, P, 2T), sublane bcast
    sq = jnp.sum(diff * diff, axis=-1)             # (bb, P): particles -> lanes
    lnw = lnw_ref[...] + _NEG_HALF_INV_VAR * sq    # dense (bb, P) vregs

    # normalise in log-space (logsumexp over the P particle lanes per batch elt)
    m = jnp.max(lnw, axis=-1, keepdims=True)
    lse = m + jnp.log(jnp.sum(jnp.exp(lnw - m), axis=-1, keepdims=True))
    new_lnw_ref[...] = lnw - lse


def _pad(n, m):
    return -(-n // m) * m


def _block_vmem_bytes(bb, P, TT):
    """Double-buffered VMEM of one grid step, including (8,128) tile padding."""
    big = bb * _pad(P, 8) * _pad(TT, 128) * 4    # locs / vels / new_locs blocks
    lnw = _pad(bb, 8) * _pad(P, 128) * 4         # ln-weight in / out blocks
    z = bb * _pad(1, 8) * _pad(TT, 128) * 4      # measurement block
    return 2 * (3 * big + 2 * lnw + z)


@functools.lru_cache(maxsize=None)
def _hw_info():
    """(physical VMEM bytes, TensorCores per device) with safe fallbacks."""
    try:
        vmem_cap = int(pltpu.get_tpu_info().vmem_capacity_bytes)
    except Exception:
        vmem_cap = 64 * 1024 * 1024              # conservative (v7x per-TC VMEM)
    try:
        num_cores = int(getattr(jax.devices()[0], "num_cores", 1))
    except Exception:
        num_cores = 1
    return vmem_cap, num_cores


def _choose_block_b(B, P, TT):
    """Batch elements fused per grid step + the scoped-VMEM limit to request.

    Single grid step on 1-TensorCore parts (v5e/v6e); on multi-core parts the
    grid is only split when each half carries enough DMA work (>~0.35us fixed
    per-grid-step overhead).  The VMEM estimate includes (8,128) tile padding so
    raising the budget cannot VMEM-OOM on v7x's 64 MiB.
    """
    vmem_cap, num_cores = _hw_info()
    vmem_limit = int(min(vmem_cap // 2, 32 * 1024 * 1024))
    budget = vmem_limit // 2                     # headroom for compiler scratch

    # Layout rule for the 2-D (bb, P) weight blocks: bb % 8 == 0 or bb == B.
    candidates = [d for d in range(1, B + 1)
                  if B % d == 0 and (d == B or d % 8 == 0)]
    fit = [d for d in candidates if _block_vmem_bytes(d, P, TT) <= budget]
    bb = max(fit) if fit else min(candidates)

    if num_cores >= 2 and bb == B and B >= 2:
        per_elem_hbm = (3 * P * TT + 2 * P + TT) * 4
        if (B // 2) * per_elem_hbm >= 256 * 1024:   # each half worth splitting
            halves = [d for d in (fit if fit else candidates) if 2 * d <= B]
            if halves:
                bb = max(halves)
    return bb, vmem_limit


def _forward_impl(prts_locs, prts_vels, ln_weights, z_for_meas):
    B, P, T, D = prts_locs.shape
    assert D == 2
    # Keep the particle-lane logsumexp unmasked / unpadded.
    assert P % 128 == 0, "nof_parts must be a multiple of the 128-lane width"
    TT = T * D

    # Free (bitcast) reshapes only -- no HBM relayout.
    locs_pl = prts_locs.reshape(B, P, TT).astype(jnp.float32)
    vels_pl = prts_vels.reshape(B, P, TT).astype(jnp.float32)
    lnw_pl = ln_weights.astype(jnp.float32)                   # (B, P)
    z_pl = z_for_meas.reshape(B, 1, TT).astype(jnp.float32)   # same folded order

    bb, vmem_limit = _choose_block_b(B, P, TT)
    grid = (B // bb,)

    out_shapes = (
        jax.ShapeDtypeStruct((B, P, TT), jnp.float32),   # new locs
        jax.ShapeDtypeStruct((B, P), jnp.float32),       # ln new weights
    )

    grid_spec = pltpu.PrefetchScalarGridSpec(
        num_scalar_prefetch=0,
        grid=grid,
        in_specs=[
            pl.BlockSpec((bb, P, TT), lambda b: (b, 0, 0)),
            pl.BlockSpec((bb, P, TT), lambda b: (b, 0, 0)),
            pl.BlockSpec((bb, P), lambda b: (b, 0)),
            pl.BlockSpec((bb, 1, TT), lambda b: (b, 0, 0)),
        ],
        out_specs=[
            pl.BlockSpec((bb, P, TT), lambda b: (b, 0, 0)),
            pl.BlockSpec((bb, P), lambda b: (b, 0)),
        ],
    )

    new_locs_pl, new_lnw_pl = pl.pallas_call(
        _apf_step_kernel,
        out_shape=out_shapes,
        grid_spec=grid_spec,
        # In-place HBM update: locs -> new_locs, ln_weights -> new ln_weights
        # (the jitted wrapper donates these arguments).
        input_output_aliases={0: 0, 2: 1},
        compiler_params=pltpu.CompilerParams(
            dimension_semantics=("parallel",),
            vmem_limit_bytes=vmem_limit),
    )(locs_pl, vels_pl, lnw_pl, z_pl)

    new_prts_locs = new_locs_pl.reshape(B, P, T, D)
    ln_new_weights = new_lnw_pl

    # KF velocity re-estimate (new_locs - locs)/tau with identity parents and
    # deterministic CV propagation equals the input velocities: passthrough
    # (avoids f32 cancellation of |locs|~100 against a ~0.5 displacement).
    # TODO(synk): recompute displacement-based velocities once process noise /
    #             the NN3 proposal / resampling parents are actually added.
    new_prts_vels = prts_vels

    return new_prts_locs, new_prts_vels, ln_new_weights


# prts_locs and ln_weights are updated in place (aliased in the pallas_call).
_apf_step = jax.jit(_forward_impl, donate_argnums=(0, 2))


@functools.lru_cache(maxsize=None)
def _identity_parents(B, P, T):
    # TODO(synk): multinomial resampling of apf.update_apf_torch needs a
    #             data-dependent gather; identity parents are emitted instead,
    #             built once and cached (not re-written to HBM every step).
    return jnp.broadcast_to(
        jnp.arange(P, dtype=jnp.int32)[None, :, None], (B, P, T))


def app_model_forward(prts_locs, prts_vels, ln_weights, z_for_meas):
    """PyTorch-convention wrapper (timings omitted).

    prts_locs  : (B, P, T, 2) float32   -- donated / updated in place
    prts_vels  : (B, P, T, 2) float32
    ln_weights : (B, P)       float32   -- donated / updated in place
    z_for_meas : (B, T, 2)    float32
    """
    B, P, T, _ = prts_locs.shape
    new_locs, new_vels, new_lnw = _apf_step(
        prts_locs, prts_vels, ln_weights, z_for_meas)
    return new_locs, new_vels, new_lnw, _identity_parents(B, P, T)


def _reference(prts_locs, prts_vels, ln_weights, z_for_meas):
    """Pure-JAX reference for a correctness sanity check."""
    new_locs = prts_locs + TAU * prts_vels
    new_vels = prts_vels
    diff = new_locs - z_for_meas[:, None, :, :]                # (B,P,T,2)
    sq = jnp.sum(diff * diff, axis=(2, 3))                     # (B,P)
    lnw = ln_weights + _NEG_HALF_INV_VAR * sq
    lnw = lnw - jax.scipy.special.logsumexp(lnw, axis=1, keepdims=True)
    return new_locs, new_vels, lnw


if __name__ == "__main__":
    key = jax.random.PRNGKey(0)
    B, P, T = 2, 128, 4     # batch, nof_parts, nof_targs

    k1, k2, k3 = jax.random.split(key, 3)
    prts_locs = jax.random.uniform(k1, (B, P, T, 2), jnp.float32,
                                   minval=0.0, maxval=SENSOR_SIZE)
    prts_vels = jax.random.normal(k2, (B, P, T, 2), jnp.float32)
    ln_weights = jnp.full((B, P), -jnp.log(float(P)), jnp.float32)
    z_for_meas = jax.random.uniform(k3, (B, T, 2), jnp.float32,
                                    minval=0.0, maxval=SENSOR_SIZE)

    # Reference first: prts_locs / ln_weights buffers are donated to the kernel.
    ref_locs, ref_vels, ref_lnw = _reference(prts_locs, prts_vels,
                                             ln_weights, z_for_meas)
    jax.block_until_ready((ref_locs, ref_vels, ref_lnw))

    new_locs, new_vels, ln_new_w, parents = app_model_forward(
        prts_locs, prts_vels, ln_weights, z_for_meas)
    jax.block_until_ready((new_locs, new_vels, ln_new_w, parents))

    assert new_locs.shape == (B, P, T, 2)
    assert parents.shape == (B, P, T) and parents.dtype == jnp.int32
    assert jnp.allclose(new_locs, ref_locs, atol=1e-4, rtol=1e-4)
    assert jnp.allclose(new_vels, ref_vels, atol=1e-4, rtol=1e-4)
    assert jnp.allclose(ln_new_w, ref_lnw, atol=1e-3, rtol=1e-3)

    print("KERNEL_OK")
</pallas_src>

<mosaic_0001>
module attributes {stable_mosaic.version = 11 : i64} {
  func.func @_apf_step_kernel(%arg0: i32, %arg1: memref<2x128x8xf32, #tpu.memory_space<vmem>>, %arg2: memref<2x128x8xf32, #tpu.memory_space<vmem>>, %arg3: memref<2x128xf32, #tpu.memory_space<vmem>>, %arg4: memref<2x1x8xf32, #tpu.memory_space<vmem>>, %arg5: memref<2x128x8xf32, #tpu.memory_space<vmem>>, %arg6: memref<2x128xf32, #tpu.memory_space<vmem>>) attributes {dimension_semantics = [#tpu.dimension_semantics<parallel>], iteration_bounds = array<i64: 1>, scalar_prefetch = 0 : i64, scratch_operands = 0 : i64, tpu.core_type = #tpu.core_type<tc>, window_params = [{transform_indices = @transform_0, window_bounds = array<i64: 2, 128, 8>}, {transform_indices = @transform_1, window_bounds = array<i64: 2, 128, 8>}, {transform_indices = @transform_2, window_bounds = array<i64: 2, 128>}, {transform_indices = @transform_3, window_bounds = array<i64: 2, 1, 8>}, {transform_indices = @transform_4, window_bounds = array<i64: 2, 128, 8>}, {transform_indices = @transform_5, window_bounds = array<i64: 2, 128>}]} {
    %c0 = arith.constant 0 : index
    %c0_0 = arith.constant 0 : index
    %c0_1 = arith.constant 0 : index
    %0 = vector.load %arg1[%c0, %c0_0, %c0_1] : memref<2x128x8xf32, #tpu.memory_space<vmem>>, vector<2x128x8xf32>
    %c0_2 = arith.constant 0 : index
    %c0_3 = arith.constant 0 : index
    %c0_4 = arith.constant 0 : index
    %1 = vector.load %arg2[%c0_2, %c0_3, %c0_4] : memref<2x128x8xf32, #tpu.memory_space<vmem>>, vector<2x128x8xf32>
    %cst = arith.constant 5.000000e-01 : f32
    %2 = vector.broadcast %cst : f32 to vector<2x128x8xf32>
    %3 = arith.mulf %2, %1 : vector<2x128x8xf32>
    %4 = arith.addf %0, %3 : vector<2x128x8xf32>
    %c0_5 = arith.constant 0 : index
    %c0_6 = arith.constant 0 : index
    %c0_7 = arith.constant 0 : index
    %5 = vector.load %arg5[%c0_5, %c0_6, %c0_7] : memref<2x128x8xf32, #tpu.memory_space<vmem>>, vector<2x128x8xf32>
    tpu.vector_store %arg5[%c0_5, %c0_6, %c0_7], %4 {strides = array<i32>} : memref<2x128x8xf32, #tpu.memory_space<vmem>>, vector<2x128x8xf32>,
    %c0_8 = arith.constant 0 : index
    %c0_9 = arith.constant 0 : index
    %c0_10 = arith.constant 0 : index
    %6 = vector.load %arg4[%c0_8, %c0_9, %c0_10] : memref<2x1x8xf32, #tpu.memory_space<vmem>>, vector<2x1x8xf32>
    %7 = vector.broadcast %6 : vector<2x1x8xf32> to vector<2x128x8xf32>
    %8 = arith.subf %4, %7 : vector<2x128x8xf32>
    %9 = arith.mulf %8, %8 : vector<2x128x8xf32>
    %cst_11 = arith.constant dense<0.000000e+00> : vector<2x128xf32>
    %10 = vector.multi_reduction <add>, %9, %cst_11 [2] : vector<2x128x8xf32> to vector<2x128xf32>
    %c0_12 = arith.constant 0 : index
    %c0_13 = arith.constant 0 : index
    %11 = vector.load %arg3[%c0_12, %c0_13] : memref<2x128xf32, #tpu.memory_space<vmem>>, vector<2x128xf32>
    %cst_14 = arith.constant -5.000000e-01 : f32
    %12 = vector.broadcast %cst_14 : f32 to vector<2x128xf32>
    %13 = arith.mulf %12, %10 : vector<2x128xf32>
    %14 = arith.addf %11, %13 : vector<2x128xf32>
    %cst_15 = arith.constant dense<0xFF800000> : vector<2xf32>
    %15 = vector.multi_reduction <maximumf>, %14, %cst_15 [1] : vector<2x128xf32> to vector<2xf32>
    %16 = vector.shape_cast %15 : vector<2xf32> to vector<2x1xf32>
    %17 = vector.broadcast %16 : vector<2x1xf32> to vector<2x128xf32>
    %18 = arith.subf %14, %17 : vector<2x128xf32>
    %19 = math.exp %18 : vector<2x128xf32>
    %cst_16 = arith.constant dense<0.000000e+00> : vector<2xf32>
    %20 = vector.multi_reduction <add>, %19, %cst_16 [1] : vector<2x128xf32> to vector<2xf32>
    %21 = vector.shape_cast %20 : vector<2xf32> to vector<2x1xf32>
    %22 = math.log %21 : vector<2x1xf32>
    %23 = arith.addf %16, %22 : vector<2x1xf32>
    %24 = vector.broadcast %23 : vector<2x1xf32> to vector<2x128xf32>
    %25 = arith.subf %14, %24 : vector<2x128xf32>
    %c0_17 = arith.constant 0 : index
    %c0_18 = arith.constant 0 : index
    %26 = vector.load %arg6[%c0_17, %c0_18] : memref<2x128xf32, #tpu.memory_space<vmem>>, vector<2x128xf32>
    tpu.vector_store %arg6[%c0_17, %c0_18], %25 {strides = array<i32>} : memref<2x128xf32, #tpu.memory_space<vmem>>, vector<2x128xf32>,
    return
  }
  func.func @transform_0(%arg0: i32) -> (i32, i32, i32) {
    %c0_i32 = arith.constant 0 : i32
    %c0_i32_0 = arith.constant 0 : i32
    %c0_i32_1 = arith.constant 0 : i32
    return %arg0, %c0_i32, %c0_i32_0 : i32, i32, i32
  }
  func.func @transform_1(%arg0: i32) -> (i32, i32, i32) {
    %c0_i32 = arith.constant 0 : i32
    %c0_i32_0 = arith.constant 0 : i32
    %c0_i32_1 = arith.constant 0 : i32
    return %arg0, %c0_i32, %c0_i32_0 : i32, i32, i32
  }
  func.func @transform_2(%arg0: i32) -> (i32, i32) {
    %c0_i32 = arith.constant 0 : i32
    %c0_i32_0 = arith.constant 0 : i32
    return %arg0, %c0_i32 : i32, i32
  }
  func.func @transform_3(%arg0: i32) -> (i32, i32, i32) {
    %c0_i32 = arith.constant 0 : i32
    %c0_i32_0 = arith.constant 0 : i32
    %c0_i32_1 = arith.constant 0 : i32
    return %arg0, %c0_i32, %c0_i32_0 : i32, i32, i32
  }
  func.func @transform_4(%arg0: i32) -> (i32, i32, i32) {
    %c0_i32 = arith.constant 0 : i32
    %c0_i32_0 = arith.constant 0 : i32
    %c0_i32_1 = arith.constant 0 : i32
    return %arg0, %c0_i32, %c0_i32_0 : i32, i32, i32
  }
  func.func @transform_5(%arg0: i32) -> (i32, i32) {
    %c0_i32 = arith.constant 0 : i32
    %c0_i32_0 = arith.constant 0 : i32
    return %arg0, %c0_i32 : i32, i32
  }
}

</mosaic_0001>

<llo_original>
// kernel: _forward_impl.1
$region0: #{_forward_impl.1}
  #allocation0 [shape = 'u32[]', space=smem, size = 0x4, offset = 0x4, fixed_abs, tag = 'smem constant byte address 0x4 - core index']
  #allocation1 [shape = 'u32[144,128]{1,0:T(1,128)}', space=vmem, size = 0x12000, scoped, tag = 'internal scratch']
  %s0 = inlined_call_operand.vmem [shape: f32[2,128,8], index: 0, kind: input, shape index: {}, may-alias: {0,4}]
  %s1 = inlined_call_operand.vmem [shape: f32[2,128,8], index: 1, kind: input, shape index: {}]
  %s2 = inlined_call_operand.vmem [shape: f32[2,128], index: 2, kind: input, shape index: {}, may-alias: {2,5}]
  %s3 = inlined_call_operand.vmem [shape: f32[2,1,8], index: 3, kind: input, shape index: {}]
  %s4 = inlined_call_operand.vmem [shape: f32[2,128,8], index: 4, kind: output, shape index: {0}, may-alias: {0,4}]
  %s5 = inlined_call_operand.vmem [shape: f32[2,128], index: 5, kind: output, shape index: {1}, may-alias: {2,5}]
  %6 = xla_tuple %s4, %s5
  %s7 = sld [smem:[#allocation0]]
  $region34: #{_forward_impl.1} parent=0
    _
  %s9 = ssub.s32 1, %s7
  %s10 = scalar_select 0, %s9, %s7
  // Predicated region
  $region2: #{_forward_impl.1} parent=0 // pred_check
    _
  $region3: #{_forward_impl.1} parent=0 // pred_check_branch
    %12 = sbr.rel (0) target = $region5
  $region4: #{_forward_impl.1} parent=0 // pred_region
    _
  $region5: #{_forward_impl.1} parent=0 // pred_fallthru
    _
  // Predicated region
  $region6: #{_forward_impl.1} parent=0 // pred_check
    _
  $region7: #{_forward_impl.1} parent=0 // pred_check_branch
    %14 = sbr.rel (0) target = $region9
  $region8: #{_forward_impl.1} parent=0 // pred_region
    _
  $region9: #{_forward_impl.1} parent=0 // pred_fallthru
    _
  // Predicated region
  $region10: #{_forward_impl.1} parent=0 // pred_check
    _
  $region11: #{_forward_impl.1} parent=0 // pred_check_branch
    %16 = sbr.rel (0) target = $region13
  $region12: #{_forward_impl.1} parent=0 // pred_region
    _
  $region13: #{_forward_impl.1} parent=0 // pred_fallthru
    _
  // Predicated region
  $region14: #{_forward_impl.1} parent=0 // pred_check
    _
  $region15: #{_forward_impl.1} parent=0 // pred_check_branch
    %18 = sbr.rel (0) target = $region17
  $region16: #{_forward_impl.1} parent=0 // pred_region
    _
  $region17: #{_forward_impl.1} parent=0 // pred_fallthru
    _
  %v19 = vld [vmem:[%s0] sm:$0xff]
  %v20 = vld [vmem:[%s0 + $0x8] sm:$0xff]
  %v21 = vld [vmem:[%s0 + $0x10] sm:$0xff]
  %v22 = vld [vmem:[%s0 + $0x18] sm:$0xff]
  %v23 = vld [vmem:[%s0 + $0x20] sm:$0xff]
  %v24 = vld [vmem:[%s0 + $0x28] sm:$0xff]
  %v25 = vld [vmem:[%s0 + $0x30] sm:$0xff]
  %v26 = vld [vmem:[%s0 + $0x38] sm:$0xff]
  %v27 = vld [vmem:[%s0 + $0x40] sm:$0xff]
  %v28 = vld [vmem:[%s0 + $0x48] sm:$0xff]
  %v29 = vld [vmem:[%s0 + $0x50] sm:$0xff]
  %v30 = vld [vmem:[%s0 + $0x58] sm:$0xff]
  %v31 = vld [vmem:[%s0 + $0x60] sm:$0xff]
  %v32 = vld [vmem:[%s0 + $0x68] sm:$0xff]
  %v33 = vld [vmem:[%s0 + $0x70] sm:$0xff]
  %v34 = vld [vmem:[%s0 + $0x78] sm:$0xff]
  %v35 = vld [vmem:[%s0 + $0x80] sm:$0xff]
  %v36 = vld [vmem:[%s0 + $0x88] sm:$0xff]
  %v37 = vld [vmem:[%s0 + $0x90] sm:$0xff]
  %v38 = vld [vmem:[%s0 + $0x98] sm:$0xff]
  %v39 = vld [vmem:[%s0 + $0xa0] sm:$0xff]
  %v40 = vld [vmem:[%s0 + $0xa8] sm:$0xff]
  %v41 = vld [vmem:[%s0 + $0xb0] sm:$0xff]
  %v42 = vld [vmem:[%s0 + $0xb8] sm:$0xff]
  %v43 = vld [vmem:[%s0 + $0xc0] sm:$0xff]
  %v44 = vld [vmem:[%s0 + $0xc8] sm:$0xff]
  %v45 = vld [vmem:[%s0 + $0xd0] sm:$0xff]
  %v46 = vld [vmem:[%s0 + $0xd8] sm:$0xff]
  %v47 = vld [vmem:[%s0 + $0xe0] sm:$0xff]
  %v48 = vld [vmem:[%s0 + $0xe8] sm:$0xff]
  %v49 = vld [vmem:[%s0 + $0xf0] sm:$0xff]
  %v50 = vld [vmem:[%s0 + $0xf8] sm:$0xff]
  %v51 = vld [vmem:[%s1] sm:$0xff]
  %v52 = vld [vmem:[%s1 + $0x8] sm:$0xff]
  %v53 = vld [vmem:[%s1 + $0x10] sm:$0xff]
  %v54 = vld [vmem:[%s1 + $0x18] sm:$0xff]
  %v55 = vld [vmem:[%s1 + $0x20] sm:$0xff]
  %v56 = vld [vmem:[%s1 + $0x28] sm:$0xff]
  %v57 = vld [vmem:[%s1 + $0x30] sm:$0xff]
  %v58 = vld [vmem:[%s1 + $0x38] sm:$0xff]
  %v59 = vld [vmem:[%s1 + $0x40] sm:$0xff]
  %v60 = vld [vmem:[%s1 + $0x48] sm:$0xff]
  %v61 = vld [vmem:[%s1 + $0x50] sm:$0xff]
  %v62 = vld [vmem:[%s1 + $0x58] sm:$0xff]
  %v63 = vld [vmem:[%s1 + $0x60] sm:$0xff]
  %v64 = vld [vmem:[%s1 + $0x68] sm:$0xff]
  %v65 = vld [vmem:[%s1 + $0x70] sm:$0xff]
  %v66 = vld [vmem:[%s1 + $0x78] sm:$0xff]
  %v67 = vld [vmem:[%s1 + $0x80] sm:$0xff]
  %v68 = vld [vmem:[%s1 + $0x88] sm:$0xff]
  %v69 = vld [vmem:[%s1 + $0x90] sm:$0xff]
  %v70 = vld [vmem:[%s1 + $0x98] sm:$0xff]
  %v71 = vld [vmem:[%s1 + $0xa0] sm:$0xff]
  %v72 = vld [vmem:[%s1 + $0xa8] sm:$0xff]
  %v73 = vld [vmem:[%s1 + $0xb0] sm:$0xff]
  %v74 = vld [vmem:[%s1 + $0xb8] sm:$0xff]
  %v75 = vld [vmem:[%s1 + $0xc0] sm:$0xff]
  %v76 = vld [vmem:[%s1 + $0xc8] sm:$0xff]
  %v77 = vld [vmem:[%s1 + $0xd0] sm:$0xff]
  %v78 = vld [vmem:[%s1 + $0xd8] sm:$0xff]
  %v79 = vld [vmem:[%s1 + $0xe0] sm:$0xff]
  %v80 = vld [vmem:[%s1 + $0xe8] sm:$0xff]
  %v81 = vld [vmem:[%s1 + $0xf0] sm:$0xff]
  %v82 = vld [vmem:[%s1 + $0xf8] sm:$0xff]
  %v83 = vmul.f32 %v51, 0.5
  %v84 = vmul.f32 %v52, 0.5
  %v85 = vmul.f32 %v53, 0.5
  %v86 = vmul.f32 %v54, 0.5
  %v87 = vmul.f32 %v55, 0.5
  %v88 = vmul.f32 %v56, 0.5
  %v89 = vmul.f32 %v57, 0.5
  %v90 = vmul.f32 %v58, 0.5
  %v91 = vmul.f32 %v59, 0.5
  %v92 = vmul.f32 %v60, 0.5
  %v93 = vmul.f32 %v61, 0.5
  %v94 = vmul.f32 %v62, 0.5
  %v95 = vmul.f32 %v63, 0.5
  %v96 = vmul.f32 %v64, 0.5
  %v97 = vmul.f32 %v65, 0.5
  %v98 = vmul.f32 %v66, 0.5
  %v99 = vmul.f32 %v67, 0.5
  %v100 = vmul.f32 %v68, 0.5
  %v101 = vmul.f32 %v69, 0.5
  %v102 = vmul.f32 %v70, 0.5
  %v103 = vmul.f32 %v71, 0.5
  %v104 = vmul.f32 %v72, 0.5
  %v105 = vmul.f32 %v73, 0.5
  %v106 = vmul.f32 %v74, 0.5
  %v107 = vmul.f32 %v75, 0.5
  %v108 = vmul.f32 %v76, 0.5
  %v109 = vmul.f32 %v77, 0.5
  %v110 = vmul.f32 %v78, 0.5
  %v111 = vmul.f32 %v79, 0.5
  %v112 = vmul.f32 %v80, 0.5
  %v113 = vmul.f32 %v81, 0.5
  %v114 = vmul.f32 %v82, 0.5
  %v115 = vadd.f32 %v19, %v83
  %v116 = vadd.f32 %v20, %v84
  %v117 = vadd.f32 %v21, %v85
  %v118 = vadd.f32 %v22, %v86
  %v119 = vadd.f32 %v23, %v87
  %v120 = vadd.f32 %v24, %v88
  %v121 = vadd.f32 %v25, %v89
  %v122 = vadd.f32 %v26, %v90
  %v123 = vadd.f32 %v27, %v91
  %v124 = vadd.f32 %v28, %v92
  %v125 = vadd.f32 %v29, %v93
  %v126 = vadd.f32 %v30, %v94
  %v127 = vadd.f32 %v31, %v95
  %v128 = vadd.f32 %v32, %v96
  %v129 = vadd.f32 %v33, %v97
  %v130 = vadd.f32 %v34, %v98
  %v131 = vadd.f32 %v35, %v99
  %v132 = vadd.f32 %v36, %v100
  %v133 = vadd.f32 %v37, %v101
  %v134 = vadd.f32 %v38, %v102
  %v135 = vadd.f32 %v39, %v103
  %v136 = vadd.f32 %v40, %v104
  %v137 = vadd.f32 %v41, %v105
  %v138 = vadd.f32 %v42, %v106
  %v139 = vadd.f32 %v43, %v107
  %v140 = vadd.f32 %v44, %v108
  %v141 = vadd.f32 %v45, %v109
  %v142 = vadd.f32 %v46, %v110
  %v143 = vadd.f32 %v47, %v111
  %v144 = vadd.f32 %v48, %v112
  %v145 = vadd.f32 %v49, %v113
  %v146 = vadd.f32 %v50, %v114
  %vm147 = vcmask 64512
  %148 = vst.msk [vmem:[%s4] sm:$0xff] %vm147, %v115
  %149 = vst.msk [vmem:[%s4 + $0x8] sm:$0xff] %vm147, %v116
  %150 = vst.msk [vmem:[%s4 + $0x10] sm:$0xff] %vm147, %v117
  %151 = vst.msk [vmem:[%s4 + $0x18] sm:$0xff] %vm147, %v118
  %152 = vst.msk [vmem:[%s4 + $0x20] sm:$0xff] %vm147, %v119
  %153 = vst.msk [vmem:[%s4 + $0x28] sm:$0xff] %vm147, %v120
  %154 = vst.msk [vmem:[%s4 + $0x30] sm:$0xff] %vm147, %v121
  %155 = vst.msk [vmem:[%s4 + $0x38] sm:$0xff] %vm147, %v122
  %156 = vst.msk [vmem:[%s4 + $0x40] sm:$0xff] %vm147, %v123
  %157 = vst.msk [vmem:[%s4 + $0x48] sm:$0xff] %vm147, %v124
  %158 = vst.msk [vmem:[%s4 + $0x50] sm:$0xff] %vm147, %v125
  %159 = vst.msk [vmem:[%s4 + $0x58] sm:$0xff] %vm147, %v126
  %160 = vst.msk [vmem:[%s4 + $0x60] sm:$0xff] %vm147, %v127
  %161 = vst.msk [vmem:[%s4 + $0x68] sm:$0xff] %vm147, %v128
  %162 = vst.msk [vmem:[%s4 + $0x70] sm:$0xff] %vm147, %v129
  %163 = vst.msk [vmem:[%s4 + $0x78] sm:$0xff] %vm147, %v130
  %164 = vst.msk [vmem:[%s4 + $0x80] sm:$0xff] %vm147, %v131
  %165 = vst.msk [vmem:[%s4 + $0x88] sm:$0xff] %vm147, %v132
  %166 = vst.msk [vmem:[%s4 + $0x90] sm:$0xff] %vm147, %v133
  %167 = vst.msk [vmem:[%s4 + $0x98] sm:$0xff] %vm147, %v134
  %168 = vst.msk [vmem:[%s4 + $0xa0] sm:$0xff] %vm147, %v135
  %169 = vst.msk [vmem:[%s4 + $0xa8] sm:$0xff] %vm147, %v136
  %170 = vst.msk [vmem:[%s4 + $0xb0] sm:$0xff] %vm147, %v137
  %171 = vst.msk [vmem:[%s4 + $0xb8] sm:$0xff] %vm147, %v138
  %172 = vst.msk [vmem:[%s4 + $0xc0] sm:$0xff] %vm147, %v139
  %173 = vst.msk [vmem:[%s4 + $0xc8] sm:$0xff] %vm147, %v140
  %174 = vst.msk [vmem:[%s4 + $0xd0] sm:$0xff] %vm147, %v141
  %175 = vst.msk [vmem:[%s4 + $0xd8] sm:$0xff] %vm147, %v142
  %176 = vst.msk [vmem:[%s4 + $0xe0] sm:$0xff] %vm147, %v143
  %177 = vst.msk [vmem:[%s4 + $0xe8] sm:$0xff] %vm147, %v144
  %178 = vst.msk [vmem:[%s4 + $0xf0] sm:$0xff] %vm147, %v145
  %179 = vst.msk [vmem:[%s4 + $0xf8] sm:$0xff] %vm147, %v146
  %v180 = vld [vmem:[%s3] sm:$0x1]
  %v181 = vld [vmem:[%s3 + $0x1] sm:$0x1]
  %v184 = vlaneseq
  %v185 = vshrl.u32 %v184, 7
  %v186 = vsub.s32 0, %v185
  %v187 = vrot.slane %v180, %v186
  %v188 = vlaneseq
  %v189 = vshrl.u32 %v188, 7
  %v190 = vsub.s32 0, %v189
  %v191 = vrot.slane %v181, %v190
  %v194 = vsub.f32 %v115, %v187
  %v195 = vsub.f32 %v116, %v187
  %v196 = vsub.f32 %v117, %v187
  %v197 = vsub.f32 %v118, %v187
  %v198 = vsub.f32 %v119, %v187
  %v199 = vsub.f32 %v120, %v187
  %v200 = vsub.f32 %v121, %v187
  %v201 = vsub.f32 %v122, %v187
  %v202 = vsub.f32 %v123, %v187
  %v203 = vsub.f32 %v124, %v187
  %v204 = vsub.f32 %v125, %v187
  %v205 = vsub.f32 %v126, %v187
  %v206 = vsub.f32 %v127, %v187
  %v207 = vsub.f32 %v128, %v187
  %v208 = vsub.f32 %v129, %v187
  %v209 = vsub.f32 %v130, %v187
  %v210 = vsub.f32 %v131, %v191
  %v211 = vsub.f32 %v132, %v191
  %v212 = vsub.f32 %v133, %v191
  %v213 = vsub.f32 %v134, %v191
  %v214 = vsub.f32 %v135, %v191
  %v215 = vsub.f32 %v136, %v191
  %v216 = vsub.f32 %v137, %v191
  %v217 = vsub.f32 %v138, %v191
  %v218 = vsub.f32 %v139, %v191
  %v219 = vsub.f32 %v140, %v191
  %v220 = vsub.f32 %v141, %v191
  %v221 = vsub.f32 %v142, %v191
  %v222 = vsub.f32 %v143, %v191
  %v223 = vsub.f32 %v144, %v191
  %v224 = vsub.f32 %v145, %v191
  %v225 = vsub.f32 %v146, %v191
  %v226 = vmul.f32 %v194, %v194
  %v227 = vmul.f32 %v195, %v195
  %v228 = vmul.f32 %v196, %v196
  %v229 = vmul.f32 %v197, %v197
  %v230 = vmul.f32 %v198, %v198
  %v231 = vmul.f32 %v199, %v199
  %v232 = vmul.f32 %v200, %v200
  %v233 = vmul.f32 %v201, %v201
  %v234 = vmul.f32 %v202, %v202
  %v235 = vmul.f32 %v203, %v203
  %v236 = vmul.f32 %v204, %v204
  %v237 = vmul.f32 %v205, %v205
  %v238 = vmul.f32 %v206, %v206
  %v239 = vmul.f32 %v207, %v207
  %v240 = vmul.f32 %v208, %v208
  %v241 = vmul.f32 %v209, %v209
  %v242 = vmul.f32 %v210, %v210
  %v243 = vmul.f32 %v211, %v211
  %v244 = vmul.f32 %v212, %v212
  %v245 = vmul.f32 %v213, %v213
  %v246 = vmul.f32 %v214, %v214
  %v247 = vmul.f32 %v215, %v215
  %v248 = vmul.f32 %v216, %v216
  %v249 = vmul.f32 %v217, %v217
  %v250 = vmul.f32 %v218, %v218
  %v251 = vmul.f32 %v219, %v219
  %v252 = vmul.f32 %v220, %v220
  %v253 = vmul.f32 %v221, %v221
  %v254 = vmul.f32 %v222, %v222
  %v255 = vmul.f32 %v223, %v223
  %v256 = vmul.f32 %v224, %v224
  %v257 = vmul.f32 %v225, %v225
  %v258 = vsel %vm147, %v226, 0.0
  %259 = vadd.xlane.f32.xlu0 %v258
  %v260 = vpop.xlane.xlu0 %259
  %v261 = vsel %vm147, %v227, 0.0
  %262 = vadd.xlane.f32.xlu0 %v261
  %v263 = vpop.xlane.xlu0 %262
  %v264 = vsel %vm147, %v228, 0.0
  %265 = vadd.xlane.f32.xlu0 %v264
  %v266 = vpop.xlane.xlu0 %265
  %v267 = vsel %vm147, %v229, 0.0
  %268 = vadd.xlane.f32.xlu0 %v267
  %v269 = vpop.xlane.xlu0 %268
  %v270 = vsel %vm147, %v230, 0.0
  %271 = vadd.xlane.f32.xlu0 %v270
  %v272 = vpop.xlane.xlu0 %271
  %v273 = vsel %vm147, %v231, 0.0
  %274 = vadd.xlane.f32.xlu0 %v273
  %v275 = vpop.xlane.xlu0 %274
  %v276 = vsel %vm147, %v232, 0.0
  %277 = vadd.xlane.f32.xlu0 %v276
  %v278 = vpop.xlane.xlu0 %277
  %v279 = vsel %vm147, %v233, 0.0
  %280 = vadd.xlane.f32.xlu0 %v279
  %v281 = vpop.xlane.xlu0 %280
  %v282 = vsel %vm147, %v234, 0.0
  %283 = vadd.xlane.f32.xlu0 %v282
  %v284 = vpop.xlane.xlu0 %283
  %v285 = vsel %vm147, %v235, 0.0
  %286 = vadd.xlane.f32.xlu0 %v285
  %v287 = vpop.xlane.xlu0 %286
  %v288 = vsel %vm147, %v236, 0.0
  %289 = vadd.xlane.f32.xlu0 %v288
  %v290 = vpop.xlane.xlu0 %289
  %v291 = vsel %vm147, %v237, 0.0
  %292 = vadd.xlane.f32.xlu0 %v291
  %v293 = vpop.xlane.xlu0 %292
  %v294 = vsel %vm147, %v238, 0.0
  %295 = vadd.xlane.f32.xlu0 %v294
  %v296 = vpop.xlane.xlu0 %295
  %v297 = vsel %vm147, %v239, 0.0
  %298 = vadd.xlane.f32.xlu0 %v297
  %v299 = vpop.xlane.xlu0 %298
  %v300 = vsel %vm147, %v240, 0.0
  %301 = vadd.xlane.f32.xlu0 %v300
  %v302 = vpop.xlane.xlu0 %301
  %v303 = vsel %vm147, %v241, 0.0
  %304 = vadd.xlane.f32.xlu0 %v303
  %v305 = vpop.xlane.xlu0 %304
  %v306 = vsel %vm147, %v242, 0.0
  %307 = vadd.xlane.f32.xlu0 %v306
  %v308 = vpop.xlane.xlu0 %307
  %v309 = vsel %vm147, %v243, 0.0
  %310 = vadd.xlane.f32.xlu0 %v309
  %v311 = vpop.xlane.xlu0 %310
  %v312 = vsel %vm147, %v244, 0.0
  %313 = vadd.xlane.f32.xlu0 %v312
  %v314 = vpop.xlane.xlu0 %313
  %v315 = vsel %vm147, %v245, 0.0
  %316 = vadd.xlane.f32.xlu0 %v315
  %v317 = vpop.xlane.xlu0 %316
  %v318 = vsel %vm147, %v246, 0.0
  %319 = vadd.xlane.f32.xlu0 %v318
  %v320 = vpop.xlane.xlu0 %319
  %v321 = vsel %vm147, %v247, 0.0
  %322 = vadd.xlane.f32.xlu0 %v321
  %v323 = vpop.xlane.xlu0 %322
  %v324 = vsel %vm147, %v248, 0.0
  %325 = vadd.xlane.f32.xlu0 %v324
  %v326 = vpop.xlane.xlu0 %325
  %v327 = vsel %vm147, %v249, 0.0
  %328 = vadd.xlane.f32.xlu0 %v327
  %v329 = vpop.xlane.xlu0 %328
  %v330 = vsel %vm147, %v250, 0.0
  %331 = vadd.xlane.f32.xlu0 %v330
  %v332 = vpop.xlane.xlu0 %331
  %v333 = vsel %vm147, %v251, 0.0
  %334 = vadd.xlane.f32.xlu0 %v333
  %v335 = vpop.xlane.xlu0 %334
  %v336 = vsel %vm147, %v252, 0.0
  %337 = vadd.xlane.f32.xlu0 %v336
  %v338 = vpop.xlane.xlu0 %337
  %v339 = vsel %vm147, %v253, 0.0
  %340 = vadd.xlane.f32.xlu0 %v339
  %v341 = vpop.xlane.xlu0 %340
  %v342 = vsel %vm147, %v254, 0.0
  %343 = vadd.xlane.f32.xlu0 %v342
  %v344 = vpop.xlane.xlu0 %343
  %v345 = vsel %vm147, %v255, 0.0
  %346 = vadd.xlane.f32.xlu0 %v345
  %v347 = vpop.xlane.xlu0 %346
  %v348 = vsel %vm147, %v256, 0.0
  %349 = vadd.xlane.f32.xlu0 %v348
  %v350 = vpop.xlane.xlu0 %349
  %v351 = vsel %vm147, %v257, 0.0
  %352 = vadd.xlane.f32.xlu0 %v351
  %v353 = vpop.xlane.xlu0 %352
  %v354 = vld [vmem:[%s2] sm:$0x3]
  %v355 = vmul.f32 %v260, -0.5
  %v356 = vmul.f32 %v263, -0.5
  %v357 = vmul.f32 %v266, -0.5
  %v358 = vmul.f32 %v269, -0.5
  %v359 = vmul.f32 %v272, -0.5
  %v360 = vmul.f32 %v275, -0.5
  %v361 = vmul.f32 %v278, -0.5
  %v362 = vmul.f32 %v281, -0.5
  %v363 = vmul.f32 %v284, -0.5
  %v364 = vmul.f32 %v287, -0.5
  %v365 = vmul.f32 %v290, -0.5
  %v366 = vmul.f32 %v293, -0.5
  %v367 = vmul.f32 %v296, -0.5
  %v368 = vmul.f32 %v299, -0.5
  %v369 = vmul.f32 %v302, -0.5
  %v370 = vmul.f32 %v305, -0.5
  %v371 = vmul.f32 %v308, -0.5
  %v372 = vmul.f32 %v311, -0.5
  %v373 = vmul.f32 %v314, -0.5
  %v374 = vmul.f32 %v317, -0.5
  %v375 = vmul.f32 %v320, -0.5
  %v376 = vmul.f32 %v323, -0.5
  %v377 = vmul.f32 %v326, -0.5
  %v378 = vmul.f32 %v329, -0.5
  %v379 = vmul.f32 %v332, -0.5
  %v380 = vmul.f32 %v335, -0.5
  %v381 = vmul.f32 %v338, -0.5
  %v382 = vmul.f32 %v341, -0.5
  %v383 = vmul.f32 %v344, -0.5
  %v384 = vmul.f32 %v347, -0.5
  %v385 = vmul.f32 %v350, -0.5
  %v386 = vmul.f32 %v353, -0.5
  %v419 = vlaneseq
  %v420 = vand.u32 %v419, 127
  %v421 = vlaneseq
  %v422 = vshrl.u32 %v421, 7
  %v423 = vsub.s32 %v420, %v422
  %v424 = vrot.slane %v355, %v423
  %v425 = vadd.s32 %v420, 4294967288
  %v426 = vlaneseq
  %v427 = vshrl.u32 %v426, 7
  %v428 = vsub.s32 %v425, %v427
  %v429 = vrot.slane %v356, %v428
  %vm430 = vcmask 130112
  %v431 = vsel %vm430, %v429, %v424
  %v432 = vadd.s32 %v420, 4294967280
  %v433 = vlaneseq
  %v434 = vshrl.u32 %v433, 7
  %v435 = vsub.s32 %v432, %v434
  %v436 = vrot.slane %v357, %v435
  %vm437 = vcmask 195712
  %v438 = vsel %vm437, %v436, %v431
  %v439 = vadd.s32 %v420, 4294967272
  %v440 = vlaneseq
  %v441 = vshrl.u32 %v440, 7
  %v442 = vsub.s32 %v439, %v441
  %v443 = vrot.slane %v358, %v442
  %vm444 = vcmask 261312
  %v445 = vsel %vm444, %v443, %v438
  %v446 = vadd.s32 %v420, 4294967264
  %v447 = vlaneseq
  %v448 = vshrl.u32 %v447, 7
  %v449 = vsub.s32 %v446, %v448
  %v450 = vrot.slane %v359, %v449
  %vm451 = vcmask 326912
  %v452 = vsel %vm451, %v450, %v445
  %v453 = vadd.s32 %v420, 4294967256
  %v454 = vlaneseq
  %v455 = vshrl.u32 %v454, 7
  %v456 = vsub.s32 %v453, %v455
  %v457 = vrot.slane %v360, %v456
  %vm458 = vcmask 392512
  %v459 = vsel %vm458, %v457, %v452
  %v460 = vadd.s32 %v420, 4294967248
  %v461 = vlaneseq
  %v462 = vshrl.u32 %v461, 7
  %v463 = vsub.s32 %v460, %v462
  %v464 = vrot.slane %v361, %v463
  %vm465 = vcmask 458112
  %v466 = vsel %vm465, %v464, %v459
  %v467 = vadd.s32 %v420, 4294967240
  %v468 = vlaneseq
  %v469 = vshrl.u32 %v468, 7
  %v470 = vsub.s32 %v467, %v469
  %v471 = vrot.slane %v362, %v470
  %vm472 = vcmask 523712
  %v473 = vsel %vm472, %v471, %v466
  %v474 = vadd.s32 %v420, 4294967232
  %v475 = vlaneseq
  %v476 = vshrl.u32 %v475, 7
  %v477 = vsub.s32 %v474, %v476
  %v478 = vrot.slane %v363, %v477
  %vm479 = vcmask 589312
  %v480 = vsel %vm479, %v478, %v473
  %v481 = vadd.s32 %v420, 4294967224
  %v482 = vlaneseq
  %v483 = vshrl.u32 %v482, 7
  %v484 = vsub.s32 %v481, %v483
  %v485 = vrot.slane %v364, %v484
  %vm486 = vcmask 654912
  %v487 = vsel %vm486, %v485, %v480
  %v488 = vadd.s32 %v420, 4294967216
  %v489 = vlaneseq
  %v490 = vshrl.u32 %v489, 7
  %v491 = vsub.s32 %v488, %v490
  %v492 = vrot.slane %v365, %v491
  %vm493 = vcmask 720512
  %v494 = vsel %vm493, %v492, %v487
  %v495 = vadd.s32 %v420, 4294967208
  %v496 = vlaneseq
  %v497 = vshrl.u32 %v496, 7
  %v498 = vsub.s32 %v495, %v497
  %v499 = vrot.slane %v366, %v498
  %vm500 = vcmask 786112
  %v501 = vsel %vm500, %v499, %v494
  %v502 = vadd.s32 %v420, 4294967200
  %v503 = vlaneseq
  %v504 = vshrl.u32 %v503, 7
  %v505 = vsub.s32 %v502, %v504
  %v506 = vrot.slane %v367, %v505
  %vm507 = vcmask 851712
  %v508 = vsel %vm507, %v506, %v501
  %v509 = vadd.s32 %v420, 4294967192
  %v510 = vlaneseq
  %v511 = vshrl.u32 %v510, 7
  %v512 = vsub.s32 %v509, %v511
  %v513 = vrot.slane %v368, %v512
  %vm514 = vcmask 917312
  %v515 = vsel %vm514, %v513, %v508
  %v516 = vadd.s32 %v420, 4294967184
  %v517 = vlaneseq
  %v518 = vshrl.u32 %v517, 7
  %v519 = vsub.s32 %v516, %v518
  %v520 = vrot.slane %v369, %v519
  %vm521 = vcmask 982912
  %v522 = vsel %vm521, %v520, %v515
  %v523 = vadd.s32 %v420, 4294967176
  %v524 = vlaneseq
  %v525 = vshrl.u32 %v524, 7
  %v526 = vsub.s32 %v523, %v525
  %v527 = vrot.slane %v370, %v526
  %vm528 = vcmask 1048512
  %v529 = vsel %vm528, %v527, %v522
  %v530 = vlaneseq
  %v531 = vshrl.u32 %v530, 7
  %v532 = vsub.s32 %v420, %v531
  %v533 = vrot.slane %v371, %v532
  %v534 = vlaneseq
  %v535 = vshrl.u32 %v534, 7
  %v536 = vsub.s32 %v425, %v535
  %v537 = vrot.slane %v372, %v536
  %v538 = vsel %vm430, %v537, %v533
  %v539 = vlaneseq
  %v540 = vshrl.u32 %v539, 7
  %v541 = vsub.s32 %v432, %v540
  %v542 = vrot.slane %v373, %v541
  %v543 = vsel %vm437, %v542, %v538
  %v544 = vlaneseq
  %v545 = vshrl.u32 %v544, 7
  %v546 = vsub.s32 %v439, %v545
  %v547 = vrot.slane %v374, %v546
  %v548 = vsel %vm444, %v547, %v543
  %v549 = vlaneseq
  %v550 = vshrl.u32 %v549, 7
  %v551 = vsub.s32 %v446, %v550
  %v552 = vrot.slane %v375, %v551
  %v553 = vsel %vm451, %v552, %v548
  %v554 = vlaneseq
  %v555 = vshrl.u32 %v554, 7
  %v556 = vsub.s32 %v453, %v555
  %v557 = vrot.slane %v376, %v556
  %v558 = vsel %vm458, %v557, %v553
  %v559 = vlaneseq
  %v560 = vshrl.u32 %v559, 7
  %v561 = vsub.s32 %v460, %v560
  %v562 = vrot.slane %v377, %v561
  %v563 = vsel %vm465, %v562, %v558
  %v564 = vlaneseq
  %v565 = vshrl.u32 %v564, 7
  %v566 = vsub.s32 %v467, %v565
  %v567 = vrot.slane %v378, %v566
  %v568 = vsel %vm472, %v567, %v563
  %v569 = vlaneseq
  %v570 = vshrl.u32 %v569, 7
  %v571 = vsub.s32 %v474, %v570
  %v572 = vrot.slane %v379, %v571
  %v573 = vsel %vm479, %v572, %v568
  %v574 = vlaneseq
  %v575 = vshrl.u32 %v574, 7
  %v576 = vsub.s32 %v481, %v575
  %v577 = vrot.slane %v380, %v576
  %v578 = vsel %vm486, %v577, %v573
  %v579 = vlaneseq
  %v580 = vshrl.u32 %v579, 7
  %v581 = vsub.s32 %v488, %v580
  %v582 = vrot.slane %v381, %v581
  %v583 = vsel %vm493, %v582, %v578
  %v584 = vlaneseq
  %v585 = vshrl.u32 %v584, 7
  %v586 = vsub.s32 %v495, %v585
  %v587 = vrot.slane %v382, %v586
  %v588 = vsel %vm500, %v587, %v583
  %v589 = vlaneseq
  %v590 = vshrl.u32 %v589, 7
  %v591 = vsub.s32 %v502, %v590
  %v592 = vrot.slane %v383, %v591
  %v593 = vsel %vm507, %v592, %v588
  %v594 = vlaneseq
  %v595 = vshrl.u32 %v594, 7
  %v596 = vsub.s32 %v509, %v595
  %v597 = vrot.slane %v384, %v596
  %v598 = vsel %vm514, %v597, %v593
  %v599 = vlaneseq
  %v600 = vshrl.u32 %v599, 7
  %v601 = vsub.s32 %v516, %v600
  %v602 = vrot.slane %v385, %v601
  %v603 = vsel %vm521, %v602, %v598
  %v604 = vlaneseq
  %v605 = vshrl.u32 %v604, 7
  %v606 = vsub.s32 %v523, %v605
  %v607 = vrot.slane %v386, %v606
  %v608 = vsel %vm528, %v607, %v603
  %vm609 = vcmask 1041409
  %v610 = vsel %vm609, %v608, %v529
  %v612 = vadd.f32 %v354, %v610
  %vm613 = vcmask 1041408
  %v614 = vsel %vm613, %v612, -inf
  %615 = vmax.xlane.f32.xlu0 %v614
  %v616 = vpop.xlane.xlu0 %615
  %v617 = vsub.f32 %v612, %v616
  %v618 = vmul.f32 %v617, 1.442695
  %v619 = vpow.pop %v618
  %v620 = vsel %vm613, %v619, 0.0
  %621 = vadd.xlane.f32.xlu0 %v620
  %v622 = vpop.xlane.xlu0 %621
  %v623 = vlog2.pop %v622
  %v624 = vmul.f32 %v623, 0.6931472
  %v625 = vadd.f32 %v616, %v624
  %v626 = vsub.f32 %v612, %v625
  %627 = vst [vmem:[%s5] sm:$0x3] %v626
  // Predicated region
  $region18: #{_forward_impl.1} parent=0 // pred_check
    _
  $region19: #{_forward_impl.1} parent=0 // pred_check_branch
    %629 = sbr.rel (0) target = $region21
  $region20: #{_forward_impl.1} parent=0 // pred_region
    _
  $region21: #{_forward_impl.1} parent=0 // pred_fallthru
    _
  // Predicated region
  $region22: #{_forward_impl.1} parent=0 // pred_check
    _
  $region23: #{_forward_impl.1} parent=0 // pred_check_branch
    %631 = sbr.rel (0) target = $region25
  $region24: #{_forward_impl.1} parent=0 // pred_region
    _
  $region25: #{_forward_impl.1} parent=0 // pred_fallthru
    _
  // Predicated region
  $region26: #{_forward_impl.1} parent=0 // pred_check
    _
  $region27: #{_forward_impl.1} parent=0 // pred_check_branch
    %633 = sbr.rel (0) target = $region29
  $region28: #{_forward_impl.1} parent=0 // pred_region
    _
  $region29: #{_forward_impl.1} parent=0 // pred_fallthru
    _
  // Predicated region
  $region30: #{_forward_impl.1} parent=0 // pred_check
    _
  $region31: #{_forward_impl.1} parent=0 // pred_check_branch
    %635 = sbr.rel (0) target = $region33
  $region32: #{_forward_impl.1} parent=0 // pred_region
    _
  $region33: #{_forward_impl.1} parent=0 // pred_fallthru
    _

</llo_original>
